<compile_context>
chip_gen: v5e
topology: v5e:2x2
jax: 0.10.0
libtpu: 0.0.40
codegen_flags: <defaults>
</compile_context>

<pallas_src>
import functools

import jax
import jax.numpy as jnp
from jax.experimental import pallas as pl
from jax.experimental.pallas import tpu as pltpu


def _round_up(x, m):
    return ((x + m - 1) // m) * m


# --------------------------------------------------------------------------- #
# Kernel
# --------------------------------------------------------------------------- #
def _quant8_matmul_kernel(x_ref, qw_ref, scales_ref, zeros_ref, bias_ref,
                          o_ref, rsum_ref, *, tkq):
    """Grid = (M/tm, N/tn, KQ/tkq); reduction axis (k) last.

    x_ref  : (tm, 4*tkq) bf16  -- natural feature order for this k block
    qw_ref : (tkq, tn) uint32  -- block-planar packed: byte s of row r is the
                                  weight of block-feature s*tkq + r
    o_ref  : (tm, tn) f32      -- raw-byte accumulator, finalized at last k
    rsum_ref: (tm, 1) f32      -- running row-sum of x (for the zeros rank-1 term)
    """
    k = pl.program_id(2)

    @pl.when(k == 0)
    def _init():
        o_ref[...] = jnp.zeros_like(o_ref)
        rsum_ref[...] = jnp.zeros_like(rsum_ref)

    x = x_ref[...]                                   # (tm, 4*tkq) bf16
    qw = qw_ref[...]                                 # (tkq, tn) uint32

    # Raw-byte matmul: unpack each byte plane (cheap shift/and) and feed the MXU
    # in bf16.  No per-tile dequant (scale/zero) work in the hot loop.
    acc = o_ref[...]
    for s in range(4):
        byte = ((qw >> (8 * s)) & jnp.uint32(0xFF)).astype(jnp.int32)
        w_s = byte.astype(jnp.float32).astype(jnp.bfloat16)     # exact for 0..255
        x_s = x[:, s * tkq:(s + 1) * tkq]                       # 128-aligned lane slice
        acc = acc + jnp.dot(x_s, w_s, preferred_element_type=jnp.float32)
    o_ref[...] = acc

    # Row-sum of the *same* bf16 activations (keeps the rank-1 correction
    # consistent with the matmul operand).
    rsum_ref[...] += jnp.sum(x.astype(jnp.float32), axis=1, keepdims=True)

    @pl.when(k == pl.num_programs(2) - 1)
    def _finalize():
        sc = scales_ref[...]                          # (1, tn) f32
        zr = zeros_ref[...]                           # (1, tn) f32
        bs = bias_ref[...]                            # (1, tn) f32
        o_ref[...] = sc * o_ref[...] - (sc * zr) * rsum_ref[...] + bs


# --------------------------------------------------------------------------- #
# Load-time parameter preparation (one-time, amortized)
# --------------------------------------------------------------------------- #
def repack_qweight_blockplanar(qweight, tkq):
    """Repack from interleaved packing (byte s of row p -> feature 4*p + s) to
    per-k-block planar packing: within each block of 4*tkq consecutive features,
    byte-plane s of packed row r holds feature s*tkq + r.  Done once at load."""
    KQ, N = qweight.shape
    assert KQ % tkq == 0
    planes = [((qweight >> (8 * s)) & jnp.uint32(0xFF)) for s in range(4)]
    q_nat = jnp.stack(planes, axis=1).reshape(4 * KQ, N)     # natural feature order
    qb = q_nat.reshape(KQ // tkq, 4, tkq, N)                 # [blk, plane, row, out]
    packed = qb[:, 0] | (qb[:, 1] << 8) | (qb[:, 2] << 16) | (qb[:, 3] << 24)
    return packed.reshape(KQ, N).astype(jnp.uint32)


def prepare_quant3linear_params(qweight, scales, zeros, bias, *,
                                tm=256, tn=256, tkq=512):
    """One-time setup: repack weights + cast small per-output vectors to f32."""
    KQ, N = qweight.shape
    tkq = min(tkq, KQ)
    tn = min(tn, N)
    assert KQ % tkq == 0, "infeatures//4 must be divisible by tkq"
    assert N % tn == 0, "outfeatures must be divisible by tn"
    return dict(
        qweight=repack_qweight_blockplanar(qweight, tkq),
        scales=scales.reshape(1, N).astype(jnp.float32),
        zeros=zeros.reshape(1, N).astype(jnp.float32),
        bias=bias.reshape(1, N).astype(jnp.float32),
        tm=tm, tn=tn, tkq=tkq,
    )


# --------------------------------------------------------------------------- #
# Forward wrapper
# --------------------------------------------------------------------------- #
def quant3linear_forward(x, params):
    qweight = params["qweight"]
    tn, tkq, tm_max = params["tn"], params["tkq"], params["tm"]
    KQ, N = qweight.shape
    K = 4 * KQ
    if x.shape[-1] != K:
        raise ValueError(f"Input feature mismatch: {K} vs {x.shape[-1]}")

    orig_shape = x.shape
    x2 = x.reshape(-1, K).astype(jnp.bfloat16)       # bf16 MXU operand, no f32 upcast
    M = x2.shape[0]

    # Batch tile: small (decode) M rounds up to a multiple of 16; large M uses tm_max.
    tm = min(tm_max, _round_up(M, 16))
    Mp = _round_up(M, tm)
    if Mp != M:
        x2 = jnp.pad(x2, ((0, Mp - M), (0, 0)))

    tk = 4 * tkq
    grid = (Mp // tm, N // tn, KQ // tkq)            # reduction axis last
    kernel = functools.partial(_quant8_matmul_kernel, tkq=tkq)

    out = pl.pallas_call(
        kernel,
        out_shape=jax.ShapeDtypeStruct((Mp, N), jnp.float32),
        grid_spec=pltpu.PrefetchScalarGridSpec(
            num_scalar_prefetch=0,
            grid=grid,
            in_specs=[
                pl.BlockSpec((tm, tk), lambda i, j, k: (i, k)),      # x (natural layout)
                pl.BlockSpec((tkq, tn), lambda i, j, k: (k, j)),     # packed weights
                pl.BlockSpec((1, tn), lambda i, j, k: (0, j)),       # scales
                pl.BlockSpec((1, tn), lambda i, j, k: (0, j)),       # zeros
                pl.BlockSpec((1, tn), lambda i, j, k: (0, j)),       # bias
            ],
            out_specs=pl.BlockSpec((tm, tn), lambda i, j, k: (i, j)),
            scratch_shapes=[pltpu.VMEM((tm, 1), jnp.float32)],       # row-sum accumulator
        ),
        compiler_params=pltpu.CompilerParams(
            dimension_semantics=("parallel", "parallel", "arbitrary")),
    )(x2, qweight, params["scales"], params["zeros"], params["bias"])

    out = out[:M]
    return out.reshape(list(orig_shape[:-1]) + [N]).astype(x.dtype)


# --------------------------------------------------------------------------- #
# Packing (mirror of Quant3Linear.pack) and pure-JAX reference
# --------------------------------------------------------------------------- #
def pack_quant3linear(weight_fp, bias, scales, zeros_float):
    """Mirror of Quant3Linear.pack() in plain JAX (original interleaved format)."""
    outfeatures, infeatures = weight_fp.shape
    assert infeatures % 4 == 0
    zeros_u8 = jnp.clip(jnp.round(zeros_float), 0, 255).astype(jnp.uint8)
    intweight = jnp.clip(
        jnp.round(weight_fp / scales[:, None]) + zeros_u8[:, None].astype(jnp.float32),
        0, 255).astype(jnp.uint8)
    intweight = intweight.T                                   # (infeatures, outfeatures)
    iw = intweight.reshape(infeatures // 4, 4, outfeatures).astype(jnp.uint32)
    qweight = iw[:, 0] | (iw[:, 1] << 8) | (iw[:, 2] << 16) | (iw[:, 3] << 24)
    return qweight, scales, zeros_u8, bias


def reference_forward(x, qweight, scales, zeros, bias):
    """Pure-JAX reference on the ORIGINAL interleaved qweight format."""
    K = qweight.shape[0] * 4
    N = qweight.shape[1]
    planes = [((qweight >> (8 * s)) & jnp.uint32(0xFF)) for s in range(4)]
    Q = jnp.stack(planes, axis=1).reshape(K, N).astype(jnp.float32)
    W = scales[None, :] * (Q - zeros.astype(jnp.float32)[None, :])
    y = x.reshape(-1, K).astype(jnp.float32) @ W + bias[None, :]
    return y.reshape(list(x.shape[:-1]) + [N])


if __name__ == "__main__":
    infeatures = 512
    outfeatures = 256
    batch, seq = 2, 4

    key = jax.random.PRNGKey(0)
    k_w, k_s, k_z, k_b, k_x = jax.random.split(key, 5)

    weight_fp = 0.02 * jax.random.normal(k_w, (outfeatures, infeatures), jnp.float32)
    scales = jax.random.uniform(k_s, (outfeatures,), jnp.float32, 0.005, 0.02)
    zeros_float = jax.random.uniform(k_z, (outfeatures,), jnp.float32, 100.0, 156.0)
    bias = 0.1 * jax.random.normal(k_b, (outfeatures,), jnp.float32)
    x = jax.random.normal(k_x, (batch, seq, infeatures), jnp.float32)

    # Pack in the original module format, then do the one-time load-time prep.
    qweight, scales, zeros_u8, bias = pack_quant3linear(weight_fp, bias, scales, zeros_float)
    params = prepare_quant3linear_params(qweight, scales, zeros_u8, bias)

    y = quant3linear_forward(x, params)
    y = jax.block_until_ready(y)

    y_ref = reference_forward(x, qweight, scales, zeros_u8, bias).reshape(y.shape)
    assert y.shape == (batch, seq, outfeatures)
    assert jnp.allclose(y, y_ref, atol=2e-2, rtol=2e-2), \
        f"max abs diff {jnp.max(jnp.abs(y - y_ref))}"

    print("KERNEL_OK")
</pallas_src>

<mosaic_0001>
module attributes {stable_mosaic.version = 11 : i64} {
  func.func @_quant8_matmul_kernel(%arg0: i32, %arg1: i32, %arg2: i32, %arg3: memref<16x512xbf16, #tpu.memory_space<vmem>>, %arg4: memref<128x256xi32, #tpu.memory_space<vmem>>, %arg5: memref<1x256xf32, #tpu.memory_space<vmem>>, %arg6: memref<1x256xf32, #tpu.memory_space<vmem>>, %arg7: memref<1x256xf32, #tpu.memory_space<vmem>>, %arg8: memref<16x256xf32, #tpu.memory_space<vmem>>, %arg9: memref<16x1xf32, #tpu.memory_space<vmem>>) attributes {dimension_semantics = [#tpu.dimension_semantics<parallel>, #tpu.dimension_semantics<parallel>, #tpu.dimension_semantics<arbitrary>], iteration_bounds = array<i64: 1, 1, 1>, scalar_prefetch = 0 : i64, scratch_operands = 1 : i64, tpu.core_type = #tpu.core_type<tc>, window_params = [{transform_indices = @transform_0, window_bounds = array<i64: 16, 512>}, {transform_indices = @transform_1, window_bounds = array<i64: 128, 256>}, {transform_indices = @transform_2, window_bounds = array<i64: 1, 256>}, {transform_indices = @transform_3, window_bounds = array<i64: 1, 256>}, {transform_indices = @transform_4, window_bounds = array<i64: 1, 256>}, {transform_indices = @transform_5, window_bounds = array<i64: 16, 256>}]} {
    %c0_i32 = arith.constant 0 : i32
    %0 = arith.cmpi eq, %arg2, %c0_i32 : i32
    %1 = arith.extui %0 : i1 to i32
    %c0_i32_0 = arith.constant 0 : i32
    %2 = arith.cmpi ne, %1, %c0_i32_0 : i32
    scf.if %2 {
      %cst_22 = arith.constant 0.000000e+00 : f32
      %52 = vector.broadcast %cst_22 : f32 to vector<16x256xf32>
      %c0_23 = arith.constant 0 : index
      %c0_24 = arith.constant 0 : index
      %53 = vector.load %arg8[%c0_23, %c0_24] : memref<16x256xf32, #tpu.memory_space<vmem>>, vector<16x256xf32>
      tpu.vector_store %arg8[%c0_23, %c0_24], %52 {strides = array<i32>} : memref<16x256xf32, #tpu.memory_space<vmem>>, vector<16x256xf32>,
      %cst_25 = arith.constant 0.000000e+00 : f32
      %54 = vector.broadcast %cst_25 : f32 to vector<16x1xf32>
      %c0_26 = arith.constant 0 : index
      %c0_27 = arith.constant 0 : index
      %55 = vector.load %arg9[%c0_26, %c0_27] : memref<16x1xf32, #tpu.memory_space<vmem>>, vector<16x1xf32>
      tpu.vector_store %arg9[%c0_26, %c0_27], %54 {strides = array<i32>} : memref<16x1xf32, #tpu.memory_space<vmem>>, vector<16x1xf32>,
    } else {
    }
    %c0 = arith.constant 0 : index
    %c0_1 = arith.constant 0 : index
    %3 = vector.load %arg3[%c0, %c0_1] : memref<16x512xbf16, #tpu.memory_space<vmem>>, vector<16x512xbf16>
    %c0_2 = arith.constant 0 : index
    %c0_3 = arith.constant 0 : index
    %4 = vector.load %arg4[%c0_2, %c0_3] : memref<128x256xi32, #tpu.memory_space<vmem>>, vector<128x256xi32>
    %c0_4 = arith.constant 0 : index
    %c0_5 = arith.constant 0 : index
    %5 = vector.load %arg8[%c0_4, %c0_5] : memref<16x256xf32, #tpu.memory_space<vmem>>, vector<16x256xf32>
    %c0_i32_6 = arith.constant 0 : i32
    %6 = vector.broadcast %c0_i32_6 : i32 to vector<128x256xi32>
    %7 = arith.shrui %4, %6 : vector<128x256xi32>
    %c255_i32 = arith.constant 255 : i32
    %8 = vector.broadcast %c255_i32 : i32 to vector<128x256xi32>
    %9 = arith.andi %7, %8 : vector<128x256xi32>
    %10 = arith.sitofp %9 : vector<128x256xi32> to vector<128x256xf32>
    %11 = arith.truncf %10 : vector<128x256xf32> to vector<128x256xbf16>
    %12 = vector.extract_strided_slice %3 {offsets = [0, 0], sizes = [16, 128], strides = [1, 1]} : vector<16x512xbf16> to vector<16x128xbf16>
    %cst = arith.constant dense<0.000000e+00> : vector<16x256xf32>
    %13 = tpu.matmul %12, %11, %cst {dimension_numbers = #tpu.dot_dimension_numbers<[1], [0], [0], [1], [0, 0, 1, 1], [], []>} : vector<16x128xbf16>, vector<128x256xbf16>, vector<16x256xf32> -> vector<16x256xf32>
    %14 = arith.addf %5, %13 : vector<16x256xf32>
    %c8_i32 = arith.constant 8 : i32
    %15 = vector.broadcast %c8_i32 : i32 to vector<128x256xi32>
    %16 = arith.shrui %4, %15 : vector<128x256xi32>
    %c255_i32_7 = arith.constant 255 : i32
    %17 = vector.broadcast %c255_i32_7 : i32 to vector<128x256xi32>
    %18 = arith.andi %16, %17 : vector<128x256xi32>
    %19 = arith.sitofp %18 : vector<128x256xi32> to vector<128x256xf32>
    %20 = arith.truncf %19 : vector<128x256xf32> to vector<128x256xbf16>
    %21 = vector.extract_strided_slice %3 {offsets = [0, 128], sizes = [16, 128], strides = [1, 1]} : vector<16x512xbf16> to vector<16x128xbf16>
    %cst_8 = arith.constant dense<0.000000e+00> : vector<16x256xf32>
    %22 = tpu.matmul %21, %20, %cst_8 {dimension_numbers = #tpu.dot_dimension_numbers<[1], [0], [0], [1], [0, 0, 1, 1], [], []>} : vector<16x128xbf16>, vector<128x256xbf16>, vector<16x256xf32> -> vector<16x256xf32>
    %23 = arith.addf %14, %22 : vector<16x256xf32>
    %c16_i32 = arith.constant 16 : i32
    %24 = vector.broadcast %c16_i32 : i32 to vector<128x256xi32>
    %25 = arith.shrui %4, %24 : vector<128x256xi32>
    %c255_i32_9 = arith.constant 255 : i32
    %26 = vector.broadcast %c255_i32_9 : i32 to vector<128x256xi32>
    %27 = arith.andi %25, %26 : vector<128x256xi32>
    %28 = arith.sitofp %27 : vector<128x256xi32> to vector<128x256xf32>
    %29 = arith.truncf %28 : vector<128x256xf32> to vector<128x256xbf16>
    %30 = vector.extract_strided_slice %3 {offsets = [0, 256], sizes = [16, 128], strides = [1, 1]} : vector<16x512xbf16> to vector<16x128xbf16>
    %cst_10 = arith.constant dense<0.000000e+00> : vector<16x256xf32>
    %31 = tpu.matmul %30, %29, %cst_10 {dimension_numbers = #tpu.dot_dimension_numbers<[1], [0], [0], [1], [0, 0, 1, 1], [], []>} : vector<16x128xbf16>, vector<128x256xbf16>, vector<16x256xf32> -> vector<16x256xf32>
    %32 = arith.addf %23, %31 : vector<16x256xf32>
    %c24_i32 = arith.constant 24 : i32
    %33 = vector.broadcast %c24_i32 : i32 to vector<128x256xi32>
    %34 = arith.shrui %4, %33 : vector<128x256xi32>
    %c255_i32_11 = arith.constant 255 : i32
    %35 = vector.broadcast %c255_i32_11 : i32 to vector<128x256xi32>
    %36 = arith.andi %34, %35 : vector<128x256xi32>
    %37 = arith.sitofp %36 : vector<128x256xi32> to vector<128x256xf32>
    %38 = arith.truncf %37 : vector<128x256xf32> to vector<128x256xbf16>
    %39 = vector.extract_strided_slice %3 {offsets = [0, 384], sizes = [16, 128], strides = [1, 1]} : vector<16x512xbf16> to vector<16x128xbf16>
    %cst_12 = arith.constant dense<0.000000e+00> : vector<16x256xf32>
    %40 = tpu.matmul %39, %38, %cst_12 {dimension_numbers = #tpu.dot_dimension_numbers<[1], [0], [0], [1], [0, 0, 1, 1], [], []>} : vector<16x128xbf16>, vector<128x256xbf16>, vector<16x256xf32> -> vector<16x256xf32>
    %41 = arith.addf %32, %40 : vector<16x256xf32>
    %c0_13 = arith.constant 0 : index
    %c0_14 = arith.constant 0 : index
    %42 = vector.load %arg8[%c0_13, %c0_14] : memref<16x256xf32, #tpu.memory_space<vmem>>, vector<16x256xf32>
    tpu.vector_store %arg8[%c0_13, %c0_14], %41 {strides = array<i32>} : memref<16x256xf32, #tpu.memory_space<vmem>>, vector<16x256xf32>,
    %c0_15 = arith.constant 0 : index
    %c0_16 = arith.constant 0 : index
    %43 = vector.load %arg9[%c0_15, %c0_16] : memref<16x1xf32, #tpu.memory_space<vmem>>, vector<16x1xf32>
    %44 = arith.extf %3 : vector<16x512xbf16> to vector<16x512xf32>
    %cst_17 = arith.constant dense<0.000000e+00> : vector<16xf32>
    %45 = vector.multi_reduction <add>, %44, %cst_17 [1] : vector<16x512xf32> to vector<16xf32>
    %46 = vector.shape_cast %45 : vector<16xf32> to vector<16x1xf32>
    %47 = arith.addf %43, %46 : vector<16x1xf32>
    %c0_18 = arith.constant 0 : index
    %c0_19 = arith.constant 0 : index
    %48 = vector.load %arg9[%c0_18, %c0_19] : memref<16x1xf32, #tpu.memory_space<vmem>>, vector<16x1xf32>
    tpu.vector_store %arg9[%c0_18, %c0_19], %47 {strides = array<i32>} : memref<16x1xf32, #tpu.memory_space<vmem>>, vector<16x1xf32>,
    %c0_i32_20 = arith.constant 0 : i32
    %49 = arith.cmpi eq, %arg2, %c0_i32_20 : i32
    %50 = arith.extui %49 : i1 to i32
    %c0_i32_21 = arith.constant 0 : i32
    %51 = arith.cmpi ne, %50, %c0_i32_21 : i32
    scf.if %51 {
      %c0_22 = arith.constant 0 : index
      %c0_23 = arith.constant 0 : index
      %52 = vector.load %arg5[%c0_22, %c0_23] : memref<1x256xf32, #tpu.memory_space<vmem>>, vector<1x256xf32>
      %c0_24 = arith.constant 0 : index
      %c0_25 = arith.constant 0 : index
      %53 = vector.load %arg6[%c0_24, %c0_25] : memref<1x256xf32, #tpu.memory_space<vmem>>, vector<1x256xf32>
      %c0_26 = arith.constant 0 : index
      %c0_27 = arith.constant 0 : index
      %54 = vector.load %arg7[%c0_26, %c0_27] : memref<1x256xf32, #tpu.memory_space<vmem>>, vector<1x256xf32>
      %c0_28 = arith.constant 0 : index
      %c0_29 = arith.constant 0 : index
      %55 = vector.load %arg8[%c0_28, %c0_29] : memref<16x256xf32, #tpu.memory_space<vmem>>, vector<16x256xf32>
      %56 = vector.broadcast %52 : vector<1x256xf32> to vector<16x256xf32>
      %57 = arith.mulf %56, %55 : vector<16x256xf32>
      %58 = arith.mulf %52, %53 : vector<1x256xf32>
      %c0_30 = arith.constant 0 : index
      %c0_31 = arith.constant 0 : index
      %59 = vector.load %arg9[%c0_30, %c0_31] : memref<16x1xf32, #tpu.memory_space<vmem>>, vector<16x1xf32>
      %60 = vector.broadcast %58 : vector<1x256xf32> to vector<16x256xf32>
      %61 = vector.broadcast %59 : vector<16x1xf32> to vector<16x256xf32>
      %62 = arith.mulf %60, %61 : vector<16x256xf32>
      %63 = arith.subf %57, %62 : vector<16x256xf32>
      %64 = vector.broadcast %54 : vector<1x256xf32> to vector<16x256xf32>
      %65 = arith.addf %63, %64 : vector<16x256xf32>
      %c0_32 = arith.constant 0 : index
      %c0_33 = arith.constant 0 : index
      %66 = vector.load %arg8[%c0_32, %c0_33] : memref<16x256xf32, #tpu.memory_space<vmem>>, vector<16x256xf32>
      tpu.vector_store %arg8[%c0_32, %c0_33], %65 {strides = array<i32>} : memref<16x256xf32, #tpu.memory_space<vmem>>, vector<16x256xf32>,
    } else {
    }
    return
  }
  func.func @transform_0(%arg0: i32, %arg1: i32, %arg2: i32) -> (i32, i32) {
    %c0_i32 = arith.constant 0 : i32
    return %arg0, %arg2 : i32, i32
  }
  func.func @transform_1(%arg0: i32, %arg1: i32, %arg2: i32) -> (i32, i32) {
    %c0_i32 = arith.constant 0 : i32
    return %arg2, %arg1 : i32, i32
  }
  func.func @transform_2(%arg0: i32, %arg1: i32, %arg2: i32) -> (i32, i32) {
    %c0_i32 = arith.constant 0 : i32
    %c0_i32_0 = arith.constant 0 : i32
    return %c0_i32, %arg1 : i32, i32
  }
  func.func @transform_3(%arg0: i32, %arg1: i32, %arg2: i32) -> (i32, i32) {
    %c0_i32 = arith.constant 0 : i32
    %c0_i32_0 = arith.constant 0 : i32
    return %c0_i32, %arg1 : i32, i32
  }
  func.func @transform_4(%arg0: i32, %arg1: i32, %arg2: i32) -> (i32, i32) {
    %c0_i32 = arith.constant 0 : i32
    %c0_i32_0 = arith.constant 0 : i32
    return %c0_i32, %arg1 : i32, i32
  }
  func.func @transform_5(%arg0: i32, %arg1: i32, %arg2: i32) -> (i32, i32) {
    %c0_i32 = arith.constant 0 : i32
    return %arg0, %arg1 : i32, i32
  }
}

</mosaic_0001>

<llo_original>
// kernel: tpu_custom_call.1
$region0: #{tpu_custom_call.1}
  #allocation0 [shape = 'u32[]', space=smem, size = 0x4, offset = 0x4, fixed_abs, tag = 'smem constant byte address 0x4 - core index']
  #allocation1 [shape = 'u32[72,128]{1,0:T(1,128)}', space=vmem, size = 0x9000, scoped, tag = 'internal scratch']
  #allocation2 [shape = 'f32[16,1]{1,0:T(8,128)}', space=vmem, size = 0x2000, scoped, tag = 'scratch operand']
  %s0 = inlined_call_operand.hbm [shape: bf16[16,512], index: 0, kind: input, shape index: {}]
  %s1 = inlined_call_operand.hbm [shape: u32[128,256], index: 1, kind: input, shape index: {}]
  %s2 = inlined_call_operand.hbm [shape: f32[1,256], index: 2, kind: input, shape index: {}]
  %s3 = inlined_call_operand.vmem [shape: f32[1,256], index: 3, kind: input, shape index: {}]
  %s4 = inlined_call_operand.hbm [shape: f32[1,256], index: 4, kind: input, shape index: {}]
  %s5 = inlined_call_operand.hbm [shape: f32[16,256], index: 5, kind: output, shape index: {}]
  %s6 = sld [smem:[#allocation0]]
  $region54: #{tpu_custom_call.1} parent=0
    _
  %s8 = ssub.s32 1, %s6
  %s9 = scalar_select 0, %s8, %s6
  $region1: #{tpu_custom_call.1} parent=0
    #allocation3 [shape = 'u8[16384]{0}', space=vmem, size = 0x4000, scoped, tag = 'input window, operand 0, single buffered']
    #allocation4 [shape = 's32[1]{0}', space=sflag, size = 0x4, scoped, tag = 'scoped memory for tpu_custom_call.1']
    #allocation5 [shape = 's32[1]{0}', space=sflag, size = 0x4, scoped, tag = 'scoped memory for tpu_custom_call.1']
    #allocation6 [shape = 'u8[131072]{0}', space=vmem, size = 0x20000, scoped, tag = 'input window, operand 1, single buffered']
    #allocation7 [shape = 's32[1]{0}', space=sflag, size = 0x4, scoped, tag = 'scoped memory for tpu_custom_call.1']
    #allocation8 [shape = 'u8[1024]{0}', space=vmem, size = 0x400, scoped, tag = 'input window, operand 2, single buffered']
    #allocation9 [shape = 'u8[1024]{0}', space=vmem, size = 0x400, scoped, tag = 'input window, operand 4, single buffered']
    #allocation10 [shape = 's32[1]{0}', space=sflag, size = 0x4, scoped, tag = 'scoped memory for tpu_custom_call.1']
    #allocation11 [shape = 'u8[16384]{0}', space=vmem, size = 0x4000, scoped, tag = 'output window, operand 0, single buffered']
    %10 = vsyncpa [#allocation4], 0
    %11 = vsyncpa [#allocation7], 0
    %12 = vsyncpa [#allocation10], 0
    %13 = vsyncpa [#allocation5], 0
    // Predicated region
    $region2: #{tpu_custom_call.1} parent=1 // pred_check
      _
    $region3: #{tpu_custom_call.1} parent=1 // pred_check_branch
      %15 = sbr.rel (0) target = $region5
    $region4: #{tpu_custom_call.1} parent=1 // pred_region
      %17 = vsyncadd [#allocation4], 0
      %s18 = sshll.u32 %s0, 4
      %s19 = int_to_ptr.hbm [resolvable:$true] %s18
      %s20 = sshll.u32 [#allocation3], 4
      %s21 = int_to_ptr.vmem [resolvable:$true] %s20
      %26 = dma.hbm_to_vmem [thread:$0]  %s19, 512, %s21, [#allocation4], 256, 256, 16
    $region5: #{tpu_custom_call.1} parent=1 // pred_fallthru
      _
    // Predicated region
    $region6: #{tpu_custom_call.1} parent=1 // pred_check
      _
    $region7: #{tpu_custom_call.1} parent=1 // pred_check_branch
      %28 = sbr.rel (0) target = $region9
    $region8: #{tpu_custom_call.1} parent=1 // pred_region
      %30 = vsyncadd [#allocation7], 0
      %s31 = sshll.u32 %s1, 4
      %s32 = int_to_ptr.hbm [resolvable:$true] %s31
      %s33 = sshll.u32 [#allocation6], 4
      %s34 = int_to_ptr.vmem [resolvable:$true] %s33
      %39 = dma.hbm_to_vmem [thread:$0]  %s32, 4096, %s34, [#allocation7], 256, 256, 16
    $region9: #{tpu_custom_call.1} parent=1 // pred_fallthru
      _
    // Predicated region
    $region10: #{tpu_custom_call.1} parent=1 // pred_check
      _
    $region11: #{tpu_custom_call.1} parent=1 // pred_check_branch
      %41 = sbr.rel (0) target = $region13
    $region12: #{tpu_custom_call.1} parent=1 // pred_region
      %43 = vsyncadd [#allocation7], 0
      %s45 = sshll.u32 %s2, 4
      %s46 = int_to_ptr.hbm [resolvable:$true] %s45
      %s47 = sshll.u32 [#allocation8], 4
      %s48 = int_to_ptr.vmem [resolvable:$true] %s47
      %50 = dma.hbm_to_vmem [thread:$0]  %s46, 32, %s48, [#allocation7]
    $region13: #{tpu_custom_call.1} parent=1 // pred_fallthru
      _
    // Predicated region
    $region14: #{tpu_custom_call.1} parent=1 // pred_check
      _
    $region15: #{tpu_custom_call.1} parent=1 // pred_check_branch
      %52 = sbr.rel (0) target = $region17
    $region16: #{tpu_custom_call.1} parent=1 // pred_region
      _
    $region17: #{tpu_custom_call.1} parent=1 // pred_fallthru
      _
    // Predicated region
    $region18: #{tpu_custom_call.1} parent=1 // pred_check
      _
    $region19: #{tpu_custom_call.1} parent=1 // pred_check_branch
      %54 = sbr.rel (0) target = $region21
    $region20: #{tpu_custom_call.1} parent=1 // pred_region
      %56 = vsyncadd [#allocation10], 0
      %s58 = sshll.u32 %s4, 4
      %s59 = int_to_ptr.hbm [resolvable:$true] %s58
      %s60 = sshll.u32 [#allocation9], 4
      %s61 = int_to_ptr.vmem [resolvable:$true] %s60
      %63 = dma.hbm_to_vmem [thread:$0]  %s59, 32, %s61, [#allocation10]
    $region21: #{tpu_custom_call.1} parent=1 // pred_fallthru
      _
    // Predicated region
    $region22: #{tpu_custom_call.1} parent=1 // pred_check
      _
    $region23: #{tpu_custom_call.1} parent=1 // pred_check_branch
      %65 = sbr.rel (0) target = $region25
    $region24: #{tpu_custom_call.1} parent=1 // pred_region
      %67 = dma.done [#allocation4], 512
    $region25: #{tpu_custom_call.1} parent=1 // pred_fallthru
      _
    // Predicated region
    $region26: #{tpu_custom_call.1} parent=1 // pred_check
      _
    $region27: #{tpu_custom_call.1} parent=1 // pred_check_branch
      %69 = sbr.rel (0) target = $region29
    $region28: #{tpu_custom_call.1} parent=1 // pred_region
      %71 = dma.done [#allocation7], 4096
    $region29: #{tpu_custom_call.1} parent=1 // pred_fallthru
      _
    // Predicated region
    $region30: #{tpu_custom_call.1} parent=1 // pred_check
      _
    $region31: #{tpu_custom_call.1} parent=1 // pred_check_branch
      %73 = sbr.rel (0) target = $region33
    $region32: #{tpu_custom_call.1} parent=1 // pred_region
      %75 = dma.done [#allocation7], 32
    $region33: #{tpu_custom_call.1} parent=1 // pred_fallthru
      _
    // Predicated region
    $region34: #{tpu_custom_call.1} parent=1 // pred_check
      _
    $region35: #{tpu_custom_call.1} parent=1 // pred_check_branch
      %77 = sbr.rel (0) target = $region37
    $region36: #{tpu_custom_call.1} parent=1 // pred_region
      %79 = dma.done [#allocation10], 32
    $region37: #{tpu_custom_call.1} parent=1 // pred_fallthru
      _
    %p80 = scmp.eq.s32.totalorder 0, 0
    // Predicated region
    $region38: #{tpu_custom_call.1} parent=1 // pred_check
      %p81 = pneg %p80
    $region39: #{tpu_custom_call.1} parent=1 // pred_check_branch
      %83 = sbr.rel (%p81) target = $region41
    $region40: #{tpu_custom_call.1} parent=1 // pred_region
      %84 = vst [vmem:[#allocation11] sm:$0xff] 0.0
      %85 = vst [vmem:[#allocation11 + $0x8] sm:$0xff] 0.0
      %86 = vst [vmem:[#allocation11 + $0x10] sm:$0xff] 0.0
      %87 = vst [vmem:[#allocation11 + $0x18] sm:$0xff] 0.0
      %vm88 = vcmask 7168
      %89 = vst.msk [vmem:[#allocation2] sm:$0xff] %vm88, 0.0
      %90 = vst.msk [vmem:[#allocation2 + $0x8] sm:$0xff] %vm88, 0.0
    $region41: #{tpu_custom_call.1} parent=1 // pred_fallthru
      _
    %v91 = vld [vmem:[#allocation3] sm:$0xff]
    %v92 = vld [vmem:[#allocation3 + $0x8] sm:$0xff]
    %v93 = vld [vmem:[#allocation3 + $0x10] sm:$0xff]
    %v94 = vld [vmem:[#allocation3 + $0x18] sm:$0xff]
    %v95 = vld [vmem:[#allocation6] sm:$0xff]
    %v96 = vld [vmem:[#allocation6 + $0x8] sm:$0xff]
    %v97 = vld [vmem:[#allocation6 + $0x10] sm:$0xff]
    %v98 = vld [vmem:[#allocation6 + $0x18] sm:$0xff]
    %v99 = vld [vmem:[#allocation6 + $0x20] sm:$0xff]
    %v100 = vld [vmem:[#allocation6 + $0x28] sm:$0xff]
    %v101 = vld [vmem:[#allocation6 + $0x30] sm:$0xff]
    %v102 = vld [vmem:[#allocation6 + $0x38] sm:$0xff]
    %v103 = vld [vmem:[#allocation6 + $0x40] sm:$0xff]
    %v104 = vld [vmem:[#allocation6 + $0x48] sm:$0xff]
    %v105 = vld [vmem:[#allocation6 + $0x50] sm:$0xff]
    %v106 = vld [vmem:[#allocation6 + $0x58] sm:$0xff]
    %v107 = vld [vmem:[#allocation6 + $0x60] sm:$0xff]
    %v108 = vld [vmem:[#allocation6 + $0x68] sm:$0xff]
    %v109 = vld [vmem:[#allocation6 + $0x70] sm:$0xff]
    %v110 = vld [vmem:[#allocation6 + $0x78] sm:$0xff]
    %v111 = vld [vmem:[#allocation6 + $0x80] sm:$0xff]
    %v112 = vld [vmem:[#allocation6 + $0x88] sm:$0xff]
    %v113 = vld [vmem:[#allocation6 + $0x90] sm:$0xff]
    %v114 = vld [vmem:[#allocation6 + $0x98] sm:$0xff]
    %v115 = vld [vmem:[#allocation6 + $0xa0] sm:$0xff]
    %v116 = vld [vmem:[#allocation6 + $0xa8] sm:$0xff]
    %v117 = vld [vmem:[#allocation6 + $0xb0] sm:$0xff]
    %v118 = vld [vmem:[#allocation6 + $0xb8] sm:$0xff]
    %v119 = vld [vmem:[#allocation6 + $0xc0] sm:$0xff]
    %v120 = vld [vmem:[#allocation6 + $0xc8] sm:$0xff]
    %v121 = vld [vmem:[#allocation6 + $0xd0] sm:$0xff]
    %v122 = vld [vmem:[#allocation6 + $0xd8] sm:$0xff]
    %v123 = vld [vmem:[#allocation6 + $0xe0] sm:$0xff]
    %v124 = vld [vmem:[#allocation6 + $0xe8] sm:$0xff]
    %v125 = vld [vmem:[#allocation6 + $0xf0] sm:$0xff]
    %v126 = vld [vmem:[#allocation6 + $0xf8] sm:$0xff]
    %v127 = vld [vmem:[#allocation11] sm:$0xff]
    %v128 = vld [vmem:[#allocation11 + $0x8] sm:$0xff]
    %v129 = vld [vmem:[#allocation11 + $0x10] sm:$0xff]
    %v130 = vld [vmem:[#allocation11 + $0x18] sm:$0xff]
    %v131 = vand.u32 %v95, 255
    %v132 = vand.u32 %v96, 255
    %v133 = vand.u32 %v97, 255
    %v134 = vand.u32 %v98, 255
    %v135 = vand.u32 %v99, 255
    %v136 = vand.u32 %v100, 255
    %v137 = vand.u32 %v101, 255
    %v138 = vand.u32 %v102, 255
    %v139 = vand.u32 %v103, 255
    %v140 = vand.u32 %v104, 255
    %v141 = vand.u32 %v105, 255
    %v142 = vand.u32 %v106, 255
    %v143 = vand.u32 %v107, 255
    %v144 = vand.u32 %v108, 255
    %v145 = vand.u32 %v109, 255
    %v146 = vand.u32 %v110, 255
    %v147 = vand.u32 %v111, 255
    %v148 = vand.u32 %v112, 255
    %v149 = vand.u32 %v113, 255
    %v150 = vand.u32 %v114, 255
    %v151 = vand.u32 %v115, 255
    %v152 = vand.u32 %v116, 255
    %v153 = vand.u32 %v117, 255
    %v154 = vand.u32 %v118, 255
    %v155 = vand.u32 %v119, 255
    %v156 = vand.u32 %v120, 255
    %v157 = vand.u32 %v121, 255
    %v158 = vand.u32 %v122, 255
    %v159 = vand.u32 %v123, 255
    %v160 = vand.u32 %v124, 255
    %v161 = vand.u32 %v125, 255
    %v162 = vand.u32 %v126, 255
    %v163 = vcvt.s32.f32 %v131
    %v164 = vcvt.s32.f32 %v132
    %v165 = vcvt.s32.f32 %v133
    %v166 = vcvt.s32.f32 %v134
    %v167 = vcvt.s32.f32 %v135
    %v168 = vcvt.s32.f32 %v136
    %v169 = vcvt.s32.f32 %v137
    %v170 = vcvt.s32.f32 %v138
    %v171 = vcvt.s32.f32 %v139
    %v172 = vcvt.s32.f32 %v140
    %v173 = vcvt.s32.f32 %v141
    %v174 = vcvt.s32.f32 %v142
    %v175 = vcvt.s32.f32 %v143
    %v176 = vcvt.s32.f32 %v144
    %v177 = vcvt.s32.f32 %v145
    %v178 = vcvt.s32.f32 %v146
    %v179 = vcvt.s32.f32 %v147
    %v180 = vcvt.s32.f32 %v148
    %v181 = vcvt.s32.f32 %v149
    %v182 = vcvt.s32.f32 %v150
    %v183 = vcvt.s32.f32 %v151
    %v184 = vcvt.s32.f32 %v152
    %v185 = vcvt.s32.f32 %v153
    %v186 = vcvt.s32.f32 %v154
    %v187 = vcvt.s32.f32 %v155
    %v188 = vcvt.s32.f32 %v156
    %v189 = vcvt.s32.f32 %v157
    %v190 = vcvt.s32.f32 %v158
    %v191 = vcvt.s32.f32 %v159
    %v192 = vcvt.s32.f32 %v160
    %v193 = vcvt.s32.f32 %v161
    %v194 = vcvt.s32.f32 %v162
    %v195 = vpack.c.bf16 %v165, %v163
    %v196 = vpack.c.bf16 %v166, %v164
    %v197 = vpack.c.bf16 %v169, %v167
    %v198 = vpack.c.bf16 %v170, %v168
    %v199 = vpack.c.bf16 %v173, %v171
    %v200 = vpack.c.bf16 %v174, %v172
    %v201 = vpack.c.bf16 %v177, %v175
    %v202 = vpack.c.bf16 %v178, %v176
    %v203 = vpack.c.bf16 %v181, %v179
    %v204 = vpack.c.bf16 %v182, %v180
    %v205 = vpack.c.bf16 %v185, %v183
    %v206 = vpack.c.bf16 %v186, %v184
    %v207 = vpack.c.bf16 %v189, %v187
    %v208 = vpack.c.bf16 %v190, %v188
    %v209 = vpack.c.bf16 %v193, %v191
    %v210 = vpack.c.bf16 %v194, %v192
    %v213 = vunpack.c.l.b16 %v91
    %v214 = vunpack.c.l.b16 %v93
    %v215 = vpack.c.b16 %v214, %v213
    %217 = vmatpush.bf16.msra.mxu0 %v209
    %218 = vmatpush.bf16.msra.mxu0 %v207
    %219 = vmatpush.bf16.msra.mxu0 %v205
    %220 = vmatpush.bf16.msra.mxu0 %v203
    %221 = vmatpush.bf16.msra.mxu0 %v201
    %222 = vmatpush.bf16.msra.mxu0 %v199
    %223 = vmatpush.bf16.msra.mxu0 %v197
    %224 = vmatpush.bf16.msra.mxu0 %v195
    %225 = vmatmul.bf16.gmra.mxu0 %v215
    %v226 = vpop.f32.mrf.mxu0
    %v227 = vadd.f32 0.0, %v226
    %v228 = vpop.f32.mrf.mxu0
    %v229 = vadd.f32 0.0, %v228
    %230 = vdwg.mxu0
    %231 = vmatpush.bf16.msra.mxu0 %v210
    %232 = vmatpush.bf16.msra.mxu0 %v208
    %233 = vmatpush.bf16.msra.mxu0 %v206
    %234 = vmatpush.bf16.msra.mxu0 %v204
    %235 = vmatpush.bf16.msra.mxu0 %v202
    %236 = vmatpush.bf16.msra.mxu0 %v200
    %237 = vmatpush.bf16.msra.mxu0 %v198
    %238 = vmatpush.bf16.msra.mxu0 %v196
    %239 = vmatmul.bf16.gmra.mxu0 %v215
    %v240 = vpop.f32.mrf.mxu0
    %v241 = vadd.f32 0.0, %v240
    %v242 = vpop.f32.mrf.mxu0
    %v243 = vadd.f32 0.0, %v242
    %244 = vdwg.mxu0
    %v245 = vadd.f32 %v127, %v227
    %v246 = vadd.f32 %v128, %v241
    %v247 = vadd.f32 %v129, %v229
    %v248 = vadd.f32 %v130, %v243
    %v249 = vshrl.u32 %v95, 8
    %v250 = vshrl.u32 %v96, 8
    %v251 = vshrl.u32 %v97, 8
    %v252 = vshrl.u32 %v98, 8
    %v253 = vshrl.u32 %v99, 8
    %v254 = vshrl.u32 %v100, 8
    %v255 = vshrl.u32 %v101, 8
    %v256 = vshrl.u32 %v102, 8
    %v257 = vshrl.u32 %v103, 8
    %v258 = vshrl.u32 %v104, 8
    %v259 = vshrl.u32 %v105, 8
    %v260 = vshrl.u32 %v106, 8
    %v261 = vshrl.u32 %v107, 8
    %v262 = vshrl.u32 %v108, 8
    %v263 = vshrl.u32 %v109, 8
    %v264 = vshrl.u32 %v110, 8
    %v265 = vshrl.u32 %v111, 8
    %v266 = vshrl.u32 %v112, 8
    %v267 = vshrl.u32 %v113, 8
    %v268 = vshrl.u32 %v114, 8
    %v269 = vshrl.u32 %v115, 8
    %v270 = vshrl.u32 %v116, 8
    %v271 = vshrl.u32 %v117, 8
    %v272 = vshrl.u32 %v118, 8
    %v273 = vshrl.u32 %v119, 8
    %v274 = vshrl.u32 %v120, 8
    %v275 = vshrl.u32 %v121, 8
    %v276 = vshrl.u32 %v122, 8
    %v277 = vshrl.u32 %v123, 8
    %v278 = vshrl.u32 %v124, 8
    %v279 = vshrl.u32 %v125, 8
    %v280 = vshrl.u32 %v126, 8
    %v281 = vand.u32 %v249, 255
    %v282 = vand.u32 %v250, 255
    %v283 = vand.u32 %v251, 255
    %v284 = vand.u32 %v252, 255
    %v285 = vand.u32 %v253, 255
    %v286 = vand.u32 %v254, 255
    %v287 = vand.u32 %v255, 255
    %v288 = vand.u32 %v256, 255
    %v289 = vand.u32 %v257, 255
    %v290 = vand.u32 %v258, 255
    %v291 = vand.u32 %v259, 255
    %v292 = vand.u32 %v260, 255
    %v293 = vand.u32 %v261, 255
    %v294 = vand.u32 %v262, 255
    %v295 = vand.u32 %v263, 255
    %v296 = vand.u32 %v264, 255
    %v297 = vand.u32 %v265, 255
    %v298 = vand.u32 %v266, 255
    %v299 = vand.u32 %v267, 255
    %v300 = vand.u32 %v268, 255
    %v301 = vand.u32 %v269, 255
    %v302 = vand.u32 %v270, 255
    %v303 = vand.u32 %v271, 255
    %v304 = vand.u32 %v272, 255
    %v305 = vand.u32 %v273, 255
    %v306 = vand.u32 %v274, 255
    %v307 = vand.u32 %v275, 255
    %v308 = vand.u32 %v276, 255
    %v309 = vand.u32 %v277, 255
    %v310 = vand.u32 %v278, 255
    %v311 = vand.u32 %v279, 255
    %v312 = vand.u32 %v280, 255
    %v313 = vcvt.s32.f32 %v281
    %v314 = vcvt.s32.f32 %v282
    %v315 = vcvt.s32.f32 %v283
    %v316 = vcvt.s32.f32 %v284
    %v317 = vcvt.s32.f32 %v285
    %v318 = vcvt.s32.f32 %v286
    %v319 = vcvt.s32.f32 %v287
    %v320 = vcvt.s32.f32 %v288
    %v321 = vcvt.s32.f32 %v289
    %v322 = vcvt.s32.f32 %v290
    %v323 = vcvt.s32.f32 %v291
    %v324 = vcvt.s32.f32 %v292
    %v325 = vcvt.s32.f32 %v293
    %v326 = vcvt.s32.f32 %v294
    %v327 = vcvt.s32.f32 %v295
    %v328 = vcvt.s32.f32 %v296
    %v329 = vcvt.s32.f32 %v297
    %v330 = vcvt.s32.f32 %v298
    %v331 = vcvt.s32.f32 %v299
    %v332 = vcvt.s32.f32 %v300
    %v333 = vcvt.s32.f32 %v301
    %v334 = vcvt.s32.f32 %v302
    %v335 = vcvt.s32.f32 %v303
    %v336 = vcvt.s32.f32 %v304
    %v337 = vcvt.s32.f32 %v305
    %v338 = vcvt.s32.f32 %v306
    %v339 = vcvt.s32.f32 %v307
    %v340 = vcvt.s32.f32 %v308
    %v341 = vcvt.s32.f32 %v309
    %v342 = vcvt.s32.f32 %v310
    %v343 = vcvt.s32.f32 %v311
    %v344 = vcvt.s32.f32 %v312
    %v345 = vpack.c.bf16 %v315, %v313
    %v346 = vpack.c.bf16 %v316, %v314
    %v347 = vpack.c.bf16 %v319, %v317
    %v348 = vpack.c.bf16 %v320, %v318
    %v349 = vpack.c.bf16 %v323, %v321
    %v350 = vpack.c.bf16 %v324, %v322
    %v351 = vpack.c.bf16 %v327, %v325
    %v352 = vpack.c.bf16 %v328, %v326
    %v353 = vpack.c.bf16 %v331, %v329
    %v354 = vpack.c.bf16 %v332, %v330
    %v355 = vpack.c.bf16 %v335, %v333
    %v356 = vpack.c.bf16 %v336, %v334
    %v357 = vpack.c.bf16 %v339, %v337
    %v358 = vpack.c.bf16 %v340, %v338
    %v359 = vpack.c.bf16 %v343, %v341
    %v360 = vpack.c.bf16 %v344, %v342
    %v361 = vunpack.c.h.b16 %v91
    %v362 = vunpack.c.h.b16 %v93
    %v363 = vpack.c.b16 %v362, %v361
    %365 = vmatpush.bf16.msra.mxu0 %v359
    %366 = vmatpush.bf16.msra.mxu0 %v357
    %367 = vmatpush.bf16.msra.mxu0 %v355
    %368 = vmatpush.bf16.msra.mxu0 %v353
    %369 = vmatpush.bf16.msra.mxu0 %v351
    %370 = vmatpush.bf16.msra.mxu0 %v349
    %371 = vmatpush.bf16.msra.mxu0 %v347
    %372 = vmatpush.bf16.msra.mxu0 %v345
    %373 = vmatmul.bf16.gmra.mxu0 %v363
    %v374 = vpop.f32.mrf.mxu0
    %v375 = vadd.f32 0.0, %v374
    %v376 = vpop.f32.mrf.mxu0
    %v377 = vadd.f32 0.0, %v376
    %378 = vdwg.mxu0
    %379 = vmatpush.bf16.msra.mxu0 %v360
    %380 = vmatpush.bf16.msra.mxu0 %v358
    %381 = vmatpush.bf16.msra.mxu0 %v356
    %382 = vmatpush.bf16.msra.mxu0 %v354
    %383 = vmatpush.bf16.msra.mxu0 %v352
    %384 = vmatpush.bf16.msra.mxu0 %v350
    %385 = vmatpush.bf16.msra.mxu0 %v348
    %386 = vmatpush.bf16.msra.mxu0 %v346
    %387 = vmatmul.bf16.gmra.mxu0 %v363
    %v388 = vpop.f32.mrf.mxu0
    %v389 = vadd.f32 0.0, %v388
    %v390 = vpop.f32.mrf.mxu0
    %v391 = vadd.f32 0.0, %v390
    %392 = vdwg.mxu0
    %v393 = vadd.f32 %v245, %v375
    %v394 = vadd.f32 %v246, %v389
    %v395 = vadd.f32 %v247, %v377
    %v396 = vadd.f32 %v248, %v391
    %v397 = vshrl.u32 %v95, 16
    %v398 = vshrl.u32 %v96, 16
    %v399 = vshrl.u32 %v97, 16
    %v400 = vshrl.u32 %v98, 16
    %v401 = vshrl.u32 %v99, 16
    %v402 = vshrl.u32 %v100, 16
    %v403 = vshrl.u32 %v101, 16
    %v404 = vshrl.u32 %v102, 16
    %v405 = vshrl.u32 %v103, 16
    %v406 = vshrl.u32 %v104, 16
    %v407 = vshrl.u32 %v105, 16
    %v408 = vshrl.u32 %v106, 16
    %v409 = vshrl.u32 %v107, 16
    %v410 = vshrl.u32 %v108, 16
    %v411 = vshrl.u32 %v109, 16
    %v412 = vshrl.u32 %v110, 16
    %v413 = vshrl.u32 %v111, 16
    %v414 = vshrl.u32 %v112, 16
    %v415 = vshrl.u32 %v113, 16
    %v416 = vshrl.u32 %v114, 16
    %v417 = vshrl.u32 %v115, 16
    %v418 = vshrl.u32 %v116, 16
    %v419 = vshrl.u32 %v117, 16
    %v420 = vshrl.u32 %v118, 16
    %v421 = vshrl.u32 %v119, 16
    %v422 = vshrl.u32 %v120, 16
    %v423 = vshrl.u32 %v121, 16
    %v424 = vshrl.u32 %v122, 16
    %v425 = vshrl.u32 %v123, 16
    %v426 = vshrl.u32 %v124, 16
    %v427 = vshrl.u32 %v125, 16
    %v428 = vshrl.u32 %v126, 16
    %v429 = vand.u32 %v397, 255
    %v430 = vand.u32 %v398, 255
    %v431 = vand.u32 %v399, 255
    %v432 = vand.u32 %v400, 255
    %v433 = vand.u32 %v401, 255
    %v434 = vand.u32 %v402, 255
    %v435 = vand.u32 %v403, 255
    %v436 = vand.u32 %v404, 255
    %v437 = vand.u32 %v405, 255
    %v438 = vand.u32 %v406, 255
    %v439 = vand.u32 %v407, 255
    %v440 = vand.u32 %v408, 255
    %v441 = vand.u32 %v409, 255
    %v442 = vand.u32 %v410, 255
    %v443 = vand.u32 %v411, 255
    %v444 = vand.u32 %v412, 255
    %v445 = vand.u32 %v413, 255
    %v446 = vand.u32 %v414, 255
    %v447 = vand.u32 %v415, 255
    %v448 = vand.u32 %v416, 255
    %v449 = vand.u32 %v417, 255
    %v450 = vand.u32 %v418, 255
    %v451 = vand.u32 %v419, 255
    %v452 = vand.u32 %v420, 255
    %v453 = vand.u32 %v421, 255
    %v454 = vand.u32 %v422, 255
    %v455 = vand.u32 %v423, 255
    %v456 = vand.u32 %v424, 255
    %v457 = vand.u32 %v425, 255
    %v458 = vand.u32 %v426, 255
    %v459 = vand.u32 %v427, 255
    %v460 = vand.u32 %v428, 255
    %v461 = vcvt.s32.f32 %v429
    %v462 = vcvt.s32.f32 %v430
    %v463 = vcvt.s32.f32 %v431
    %v464 = vcvt.s32.f32 %v432
    %v465 = vcvt.s32.f32 %v433
    %v466 = vcvt.s32.f32 %v434
    %v467 = vcvt.s32.f32 %v435
    %v468 = vcvt.s32.f32 %v436
    %v469 = vcvt.s32.f32 %v437
    %v470 = vcvt.s32.f32 %v438
    %v471 = vcvt.s32.f32 %v439
    %v472 = vcvt.s32.f32 %v440
    %v473 = vcvt.s32.f32 %v441
    %v474 = vcvt.s32.f32 %v442
    %v475 = vcvt.s32.f32 %v443
    %v476 = vcvt.s32.f32 %v444
    %v477 = vcvt.s32.f32 %v445
    %v478 = vcvt.s32.f32 %v446
    %v479 = vcvt.s32.f32 %v447
    %v480 = vcvt.s32.f32 %v448
    %v481 = vcvt.s32.f32 %v449
    %v482 = vcvt.s32.f32 %v450
    %v483 = vcvt.s32.f32 %v451
    %v484 = vcvt.s32.f32 %v452
    %v485 = vcvt.s32.f32 %v453
    %v486 = vcvt.s32.f32 %v454
    %v487 = vcvt.s32.f32 %v455
    %v488 = vcvt.s32.f32 %v456
    %v489 = vcvt.s32.f32 %v457
    %v490 = vcvt.s32.f32 %v458
    %v491 = vcvt.s32.f32 %v459
    %v492 = vcvt.s32.f32 %v460
    %v493 = vpack.c.bf16 %v463, %v461
    %v494 = vpack.c.bf16 %v464, %v462
    %v495 = vpack.c.bf16 %v467, %v465
    %v496 = vpack.c.bf16 %v468, %v466
    %v497 = vpack.c.bf16 %v471, %v469
    %v498 = vpack.c.bf16 %v472, %v470
    %v499 = vpack.c.bf16 %v475, %v473
    %v500 = vpack.c.bf16 %v476, %v474
    %v501 = vpack.c.bf16 %v479, %v477
    %v502 = vpack.c.bf16 %v480, %v478
    %v503 = vpack.c.bf16 %v483, %v481
    %v504 = vpack.c.bf16 %v484, %v482
    %v505 = vpack.c.bf16 %v487, %v485
    %v506 = vpack.c.bf16 %v488, %v486
    %v507 = vpack.c.bf16 %v491, %v489
    %v508 = vpack.c.bf16 %v492, %v490
    %v511 = vunpack.c.l.b16 %v92
    %v512 = vunpack.c.l.b16 %v94
    %v513 = vpack.c.b16 %v512, %v511
    %515 = vmatpush.bf16.msra.mxu0 %v507
    %516 = vmatpush.bf16.msra.mxu0 %v505
    %517 = vmatpush.bf16.msra.mxu0 %v503
    %518 = vmatpush.bf16.msra.mxu0 %v501
    %519 = vmatpush.bf16.msra.mxu0 %v499
    %520 = vmatpush.bf16.msra.mxu0 %v497
    %521 = vmatpush.bf16.msra.mxu0 %v495
    %522 = vmatpush.bf16.msra.mxu0 %v493
    %523 = vmatmul.bf16.gmra.mxu0 %v513
    %v524 = vpop.f32.mrf.mxu0
    %v525 = vadd.f32 0.0, %v524
    %v526 = vpop.f32.mrf.mxu0
    %v527 = vadd.f32 0.0, %v526
    %528 = vdwg.mxu0
    %529 = vmatpush.bf16.msra.mxu0 %v508
    %530 = vmatpush.bf16.msra.mxu0 %v506
    %531 = vmatpush.bf16.msra.mxu0 %v504
    %532 = vmatpush.bf16.msra.mxu0 %v502
    %533 = vmatpush.bf16.msra.mxu0 %v500
    %534 = vmatpush.bf16.msra.mxu0 %v498
    %535 = vmatpush.bf16.msra.mxu0 %v496
    %536 = vmatpush.bf16.msra.mxu0 %v494
    %537 = vmatmul.bf16.gmra.mxu0 %v513
    %v538 = vpop.f32.mrf.mxu0
    %v539 = vadd.f32 0.0, %v538
    %v540 = vpop.f32.mrf.mxu0
    %v541 = vadd.f32 0.0, %v540
    %542 = vdwg.mxu0
    %v543 = vadd.f32 %v393, %v525
    %v544 = vadd.f32 %v394, %v539
    %v545 = vadd.f32 %v395, %v527
    %v546 = vadd.f32 %v396, %v541
    %v547 = vshrl.u32 %v95, 24
    %v548 = vshrl.u32 %v96, 24
    %v549 = vshrl.u32 %v97, 24
    %v550 = vshrl.u32 %v98, 24
    %v551 = vshrl.u32 %v99, 24
    %v552 = vshrl.u32 %v100, 24
    %v553 = vshrl.u32 %v101, 24
    %v554 = vshrl.u32 %v102, 24
    %v555 = vshrl.u32 %v103, 24
    %v556 = vshrl.u32 %v104, 24
    %v557 = vshrl.u32 %v105, 24
    %v558 = vshrl.u32 %v106, 24
    %v559 = vshrl.u32 %v107, 24
    %v560 = vshrl.u32 %v108, 24
    %v561 = vshrl.u32 %v109, 24
    %v562 = vshrl.u32 %v110, 24
    %v563 = vshrl.u32 %v111, 24
    %v564 = vshrl.u32 %v112, 24
    %v565 = vshrl.u32 %v113, 24
    %v566 = vshrl.u32 %v114, 24
    %v567 = vshrl.u32 %v115, 24
    %v568 = vshrl.u32 %v116, 24
    %v569 = vshrl.u32 %v117, 24
    %v570 = vshrl.u32 %v118, 24
    %v571 = vshrl.u32 %v119, 24
    %v572 = vshrl.u32 %v120, 24
    %v573 = vshrl.u32 %v121, 24
    %v574 = vshrl.u32 %v122, 24
    %v575 = vshrl.u32 %v123, 24
    %v576 = vshrl.u32 %v124, 24
    %v577 = vshrl.u32 %v125, 24
    %v578 = vshrl.u32 %v126, 24
    %v579 = vand.u32 %v547, 255
    %v580 = vand.u32 %v548, 255
    %v581 = vand.u32 %v549, 255
    %v582 = vand.u32 %v550, 255
    %v583 = vand.u32 %v551, 255
    %v584 = vand.u32 %v552, 255
    %v585 = vand.u32 %v553, 255
    %v586 = vand.u32 %v554, 255
    %v587 = vand.u32 %v555, 255
    %v588 = vand.u32 %v556, 255
    %v589 = vand.u32 %v557, 255
    %v590 = vand.u32 %v558, 255
    %v591 = vand.u32 %v559, 255
    %v592 = vand.u32 %v560, 255
    %v593 = vand.u32 %v561, 255
    %v594 = vand.u32 %v562, 255
    %v595 = vand.u32 %v563, 255
    %v596 = vand.u32 %v564, 255
    %v597 = vand.u32 %v565, 255
    %v598 = vand.u32 %v566, 255
    %v599 = vand.u32 %v567, 255
    %v600 = vand.u32 %v568, 255
    %v601 = vand.u32 %v569, 255
    %v602 = vand.u32 %v570, 255
    %v603 = vand.u32 %v571, 255
    %v604 = vand.u32 %v572, 255
    %v605 = vand.u32 %v573, 255
    %v606 = vand.u32 %v574, 255
    %v607 = vand.u32 %v575, 255
    %v608 = vand.u32 %v576, 255
    %v609 = vand.u32 %v577, 255
    %v610 = vand.u32 %v578, 255
    %v611 = vcvt.s32.f32 %v579
    %v612 = vcvt.s32.f32 %v580
    %v613 = vcvt.s32.f32 %v581
    %v614 = vcvt.s32.f32 %v582
    %v615 = vcvt.s32.f32 %v583
    %v616 = vcvt.s32.f32 %v584
    %v617 = vcvt.s32.f32 %v585
    %v618 = vcvt.s32.f32 %v586
    %v619 = vcvt.s32.f32 %v587
    %v620 = vcvt.s32.f32 %v588
    %v621 = vcvt.s32.f32 %v589
    %v622 = vcvt.s32.f32 %v590
    %v623 = vcvt.s32.f32 %v591
    %v624 = vcvt.s32.f32 %v592
    %v625 = vcvt.s32.f32 %v593
    %v626 = vcvt.s32.f32 %v594
    %v627 = vcvt.s32.f32 %v595
    %v628 = vcvt.s32.f32 %v596
    %v629 = vcvt.s32.f32 %v597
    %v630 = vcvt.s32.f32 %v598
    %v631 = vcvt.s32.f32 %v599
    %v632 = vcvt.s32.f32 %v600
    %v633 = vcvt.s32.f32 %v601
    %v634 = vcvt.s32.f32 %v602
    %v635 = vcvt.s32.f32 %v603
    %v636 = vcvt.s32.f32 %v604
    %v637 = vcvt.s32.f32 %v605
    %v638 = vcvt.s32.f32 %v606
    %v639 = vcvt.s32.f32 %v607
    %v640 = vcvt.s32.f32 %v608
    %v641 = vcvt.s32.f32 %v609
    %v642 = vcvt.s32.f32 %v610
    %v643 = vpack.c.bf16 %v613, %v611
    %v644 = vpack.c.bf16 %v614, %v612
    %v645 = vpack.c.bf16 %v617, %v615
    %v646 = vpack.c.bf16 %v618, %v616
    %v647 = vpack.c.bf16 %v621, %v619
    %v648 = vpack.c.bf16 %v622, %v620
    %v649 = vpack.c.bf16 %v625, %v623
    %v650 = vpack.c.bf16 %v626, %v624
    %v651 = vpack.c.bf16 %v629, %v627
    %v652 = vpack.c.bf16 %v630, %v628
    %v653 = vpack.c.bf16 %v633, %v631
    %v654 = vpack.c.bf16 %v634, %v632
    %v655 = vpack.c.bf16 %v637, %v635
    %v656 = vpack.c.bf16 %v638, %v636
    %v657 = vpack.c.bf16 %v641, %v639
    %v658 = vpack.c.bf16 %v642, %v640
    %v659 = vunpack.c.h.b16 %v92
    %v660 = vunpack.c.h.b16 %v94
    %v661 = vpack.c.b16 %v660, %v659
    %663 = vmatpush.bf16.msra.mxu0 %v657
    %664 = vmatpush.bf16.msra.mxu0 %v655
    %665 = vmatpush.bf16.msra.mxu0 %v653
    %666 = vmatpush.bf16.msra.mxu0 %v651
    %667 = vmatpush.bf16.msra.mxu0 %v649
    %668 = vmatpush.bf16.msra.mxu0 %v647
    %669 = vmatpush.bf16.msra.mxu0 %v645
    %670 = vmatpush.bf16.msra.mxu0 %v643
    %671 = vmatmul.bf16.gmra.mxu0 %v661
    %v672 = vpop.f32.mrf.mxu0
    %v673 = vadd.f32 0.0, %v672
    %v674 = vpop.f32.mrf.mxu0
    %v675 = vadd.f32 0.0, %v674
    %676 = vdwg.mxu0
    %677 = vmatpush.bf16.msra.mxu0 %v658
    %678 = vmatpush.bf16.msra.mxu0 %v656
    %679 = vmatpush.bf16.msra.mxu0 %v654
    %680 = vmatpush.bf16.msra.mxu0 %v652
    %681 = vmatpush.bf16.msra.mxu0 %v650
    %682 = vmatpush.bf16.msra.mxu0 %v648
    %683 = vmatpush.bf16.msra.mxu0 %v646
    %684 = vmatpush.bf16.msra.mxu0 %v644
    %685 = vmatmul.bf16.gmra.mxu0 %v661
    %v686 = vpop.f32.mrf.mxu0
    %v687 = vadd.f32 0.0, %v686
    %v688 = vpop.f32.mrf.mxu0
    %v689 = vadd.f32 0.0, %v688
    %690 = vdwg.mxu0
    %v691 = vadd.f32 %v543, %v673
    %v692 = vadd.f32 %v544, %v687
    %v693 = vadd.f32 %v545, %v675
    %v694 = vadd.f32 %v546, %v689
    %695 = vst [vmem:[#allocation11] sm:$0xff] %v691
    %696 = vst [vmem:[#allocation11 + $0x8] sm:$0xff] %v692
    %697 = vst [vmem:[#allocation11 + $0x10] sm:$0xff] %v693
    %698 = vst [vmem:[#allocation11 + $0x18] sm:$0xff] %v694
    %v699 = vld [vmem:[#allocation2] sm:$0xff]
    %v700 = vld [vmem:[#allocation2 + $0x8] sm:$0xff]
    %v701 = vunpack.c.l.bf16 %v91
    %v702 = vunpack.c.h.bf16 %v91
    %v703 = vunpack.c.l.bf16 %v92
    %v704 = vunpack.c.h.bf16 %v92
    %v705 = vunpack.c.l.bf16 %v93
    %v706 = vunpack.c.h.bf16 %v93
    %v707 = vunpack.c.l.bf16 %v94
    %v708 = vunpack.c.h.bf16 %v94
    %v709 = vadd.f32 %v701, %v702
    %v710 = vadd.f32 %v709, %v703
    %v711 = vadd.f32 %v710, %v704
    %712 = vadd.xlane.f32.xlu0 %v711
    %v713 = vpop.xlane.xlu0 %712
    %v714 = vadd.f32 %v705, %v706
    %v715 = vadd.f32 %v714, %v707
    %v716 = vadd.f32 %v715, %v708
    %717 = vadd.xlane.f32.xlu0 %v716
    %v718 = vpop.xlane.xlu0 %717
    %v719 = vadd.f32 %v699, %v713
    %v720 = vadd.f32 %v700, %v718
    %vm721 = vcmask 7168
    %722 = vst.msk [vmem:[#allocation2] sm:$0xff] %vm721, %v719
    %723 = vst.msk [vmem:[#allocation2 + $0x8] sm:$0xff] %vm721, %v720
    // Predicated region
    $region42: #{tpu_custom_call.1} parent=1 // pred_check
      %p724 = pneg %p80
    $region43: #{tpu_custom_call.1} parent=1 // pred_check_branch
      %726 = sbr.rel (%p724) target = $region45
    $region44: #{tpu_custom_call.1} parent=1 // pred_region
      %v727 = vld [vmem:[#allocation8] sm:$0x3]
      %v728 = vld [vmem:[%s3] sm:$0x3]
      %v729 = vld [vmem:[#allocation9] sm:$0x3]
      %v730 = vld [vmem:[#allocation11] sm:$0xff]
      %v731 = vld [vmem:[#allocation11 + $0x8] sm:$0xff]
      %v732 = vld [vmem:[#allocation11 + $0x10] sm:$0xff]
      %v733 = vld [vmem:[#allocation11 + $0x18] sm:$0xff]
      %v735 = vperm.slane %v727, 0
      %v736 = vperm.slane %v727, 1
      %v739 = vmul.f32 %v735, %v730
      %v740 = vmul.f32 %v736, %v731
      %v741 = vmul.f32 %v735, %v732
      %v742 = vmul.f32 %v736, %v733
      %v743 = vmul.f32 %v727, %v728
      %v744 = vld [vmem:[#allocation2] sm:$0xff]
      %v745 = vld [vmem:[#allocation2 + $0x8] sm:$0xff]
      %v747 = vperm.slane %v743, 0
      %v748 = vperm.slane %v743, 1
      %752 = vset.pattern.permute.xlu0 0
      %753 = vperm.xlu0 %752, %v744
      %v754 = vpop.permute.xlu0 %753
      %757 = vset.pattern.permute.xlu0 0
      %758 = vperm.xlu0 %757, %v745
      %v759 = vpop.permute.xlu0 %758
      %v761 = vmul.f32 %v747, %v754
      %v762 = vmul.f32 %v748, %v754
      %v763 = vmul.f32 %v747, %v759
      %v764 = vmul.f32 %v748, %v759
      %v765 = vsub.f32 %v739, %v761
      %v766 = vsub.f32 %v740, %v762
      %v767 = vsub.f32 %v741, %v763
      %v768 = vsub.f32 %v742, %v764
      %v770 = vperm.slane %v729, 0
      %v771 = vperm.slane %v729, 1
      %v774 = vadd.f32 %v765, %v770
      %v775 = vadd.f32 %v766, %v771
      %v776 = vadd.f32 %v767, %v770
      %v777 = vadd.f32 %v768, %v771
      %778 = vst [vmem:[#allocation11] sm:$0xff] %v774
      %779 = vst [vmem:[#allocation11 + $0x8] sm:$0xff] %v775
      %780 = vst [vmem:[#allocation11 + $0x10] sm:$0xff] %v776
      %781 = vst [vmem:[#allocation11 + $0x18] sm:$0xff] %v777
    $region45: #{tpu_custom_call.1} parent=1 // pred_fallthru
      _
    // Predicated region
    $region46: #{tpu_custom_call.1} parent=1 // pred_check
      _
    $region47: #{tpu_custom_call.1} parent=1 // pred_check_branch
      %783 = sbr.rel (0) target = $region49
    $region48: #{tpu_custom_call.1} parent=1 // pred_region
      %785 = vsyncadd [#allocation5], 0
      %s786 = sshll.u32 [#allocation11], 4
      %s787 = int_to_ptr.vmem [resolvable:$true] %s786
      %s788 = sshll.u32 %s5, 4
      %s789 = int_to_ptr.hbm [resolvable:$true] %s788
      %794 = dma.vmem_to_hbm [thread:$0]  %s787, 512, %s789, [#allocation5], 256, 256, 16
    $region49: #{tpu_custom_call.1} parent=1 // pred_fallthru
      _
    // Predicated region
    $region50: #{tpu_custom_call.1} parent=1 // pred_check
      _
    $region51: #{tpu_custom_call.1} parent=1 // pred_check_branch
      %796 = sbr.rel (0) target = $region53
    $region52: #{tpu_custom_call.1} parent=1 // pred_region
      %798 = dma.done [#allocation5], 512
    $region53: #{tpu_custom_call.1} parent=1 // pred_fallthru
      _
    %799 = vsyncpa [#allocation4], 1
    %800 = vsyncpa [#allocation7], 1
    %801 = vsyncpa [#allocation10], 1
    %802 = vsyncpa [#allocation5], 1

</llo_original>
